<compile_context>
chip_gen: v5e
topology: v5e:2x2
jax: 0.10.0
libtpu: 0.0.40
codegen_flags: <defaults>
</compile_context>

<pallas_src>
import functools

import jax
import jax.numpy as jnp
from jax import lax
from jax.experimental import pallas as pl
from jax.experimental.pallas import tpu as pltpu


def _cdiv(a, b):
    return (a + b - 1) // b


def _round_up(x, m):
    return _cdiv(x, m) * m


def _balanced_tile(n, cap, granule):
    """Largest tile <= cap (multiple of `granule`) that splits n into balanced
    pieces, bounding padding to roughly one granule per tile."""
    cap = max(granule, min(cap, _round_up(n, granule)))
    ntiles = _cdiv(n, cap)
    return _round_up(_cdiv(n, ntiles), granule)


def _vmem_budget_bytes():
    """Generation-aware VMEM budget (~56 MiB on v7x, ~100 MiB on v5e/v6e)."""
    cap = None
    try:
        cap = getattr(pltpu.get_tpu_info(), "vmem_capacity_bytes", None)
    except Exception:
        cap = None
    if not cap:
        cap = 64 * 1024 * 1024  # conservative default: v7x per-core VMEM
    return int(max(min(cap - 8 * 1024 * 1024, 100 * 1024 * 1024),
                   16 * 1024 * 1024))


def _pick_hidden_tile(B, WD, D, budget):
    """Largest balanced B tile whose (double-buffered) working set fits VMEM."""
    WDl = _round_up(WD, 128)
    Dl = _round_up(D, 128)
    tb_cap = 1024
    while True:
        tb = _balanced_tile(B, tb_cap, 16)
        ws = (2 * tb * WDl * 2      # flat tile (bf16, double-buffered)
              + 2 * D * WDl * 2     # W1 (worst case double-buffered)
              + 2 * tb * Dl * 2     # h tile (bf16, double-buffered)
              + 8 * Dl * 4)         # bias (padded)
        if ws <= budget or tb_cap == 16:
            return tb
        tb_cap //= 2


def _pick_proj_tiles(B, V, D, budget, out_bytes):
    """Balanced (B, V) tiles for the projection: prefer a large V tile (fewer
    h re-streams / pipeline steps), shrink the B tile first when over budget."""
    Dl = _round_up(D, 128)
    tb_cap, tv_cap = 1024, 2048
    while True:
        tb = _balanced_tile(B, tb_cap, 16)
        tv = _balanced_tile(V, tv_cap, 128)
        ws = (2 * tb * Dl * 2             # h tile (bf16, double-buffered)
              + 2 * tv * Dl * 2           # emb tile (bf16, double-buffered)
              + 2 * tb * tv * out_bytes)  # logits tile (double-buffered)
        if ws <= budget or (tb_cap == 16 and tv_cap == 128):
            return tb, tv
        if tb_cap > 64 or tv_cap == 128:
            tb_cap = max(16, tb_cap // 2)
        else:
            tv_cap = max(128, tv_cap // 2)


def _hidden_kernel(flat_ref, w1_ref, b1_ref, h_ref):
    # h_tile = tanh(flat_tile @ W1^T + b1); W1 kept in torch (D, W*D) layout,
    # so contract dim 1 of both operands (no transpose); f32 MXU accumulation.
    acc = lax.dot_general(
        flat_ref[...], w1_ref[...],
        dimension_numbers=(((1,), (1,)), ((), ())),
        preferred_element_type=jnp.float32)
    h_ref[...] = jnp.tanh(acc + b1_ref[...]).astype(h_ref.dtype)


def _proj_kernel(h_ref, emb_ref, out_ref):
    # logits_tile = h_tile @ E_tile^T (tied output embedding, no bias).
    # Cast to out_ref.dtype (bf16 by default) -> halved, lane-dense writeback.
    out_ref[...] = lax.dot_general(
        h_ref[...], emb_ref[...],
        dimension_numbers=(((1,), (1,)), ((), ())),
        preferred_element_type=jnp.float32).astype(out_ref.dtype)


def ffnn_forward(x_idx, emb_weight, lin_weight, lin_bias, *,
                 out_dtype=jnp.bfloat16, single_buffer_invariant=True):
    """Forward pass of FFNN with tied input/output embeddings.

    x_idx:      (B, W) int32 token ids.
    emb_weight: (V, D) f32 embedding table (also the tied output projection).
    lin_weight: (D, W*D) f32 torch-style Linear weight (consumed as stored).
    lin_bias:   (D,) f32 Linear bias.
    Returns logits (B, V) in `out_dtype` (bf16 by default).
    """
    B, W = x_idx.shape
    V, D = emb_weight.shape
    WD = W * D
    out_bytes = jnp.dtype(out_dtype).itemsize

    budget = _vmem_budget_bytes()

    emb_bf = emb_weight.astype(jnp.bfloat16)            # (V, D), as stored
    w1_bf = lin_weight.astype(jnp.bfloat16)             # (D, WD), as stored
    b1_2d = lin_bias.reshape(1, D).astype(jnp.float32)  # (1, D)

    # Embedding gather + flatten (glue; indices drive an XLA gather in bf16).
    # TODO(synk): fuse this gather into stage 1 via scalar-prefetched indices
    # (PrefetchScalarGridSpec) + per-row DMA so the (B, W*D) intermediate
    # never round-trips HBM.
    flat = jnp.take(emb_bf, x_idx, axis=0).reshape(B, WD)   # (B, WD) bf16

    def invariant_spec(shape, imap):
        # Grid-invariant operands: a second pipeline buffer is pure VMEM waste.
        if single_buffer_invariant:
            return pl.BlockSpec(shape, imap, pipeline_mode=pl.Buffered(1))
        return pl.BlockSpec(shape, imap)

    # ---- Stage 1: hidden activation for the whole batch --------------------
    tb1 = _pick_hidden_tile(B, WD, D, budget)
    Bp1 = _round_up(B, tb1)
    nb1 = Bp1 // tb1
    if Bp1 != B:
        flat = jnp.pad(flat, ((0, Bp1 - B), (0, 0)))

    h_full = pl.pallas_call(
        _hidden_kernel,
        out_shape=jax.ShapeDtypeStruct((Bp1, D), jnp.bfloat16),
        grid=(nb1,),
        in_specs=[
            pl.BlockSpec((tb1, WD), lambda i: (i, 0)),     # flat: streamed over B
            invariant_spec((D, WD), lambda i: (0, 0)),     # W1: resident, 1 buffer
            invariant_spec((1, D), lambda i: (0, 0)),      # bias: resident, 1 buffer
        ],
        out_specs=pl.BlockSpec((tb1, D), lambda i: (i, 0)),
        compiler_params=pltpu.CompilerParams(
            dimension_semantics=("parallel",),
            vmem_limit_bytes=budget),
        cost_estimate=pl.CostEstimate(
            flops=2 * Bp1 * WD * D,
            transcendentals=Bp1 * D,
            bytes_accessed=Bp1 * WD * 2 + D * WD * 2 + D * 4 + Bp1 * D * 2),
    )(flat, w1_bf, b1_2d)
    # TODO(synk): if D*W*D*2 alone approaches the VMEM budget, split the K
    # (W*D) dimension of this matmul instead of holding all of W1 resident.

    # ---- Stage 2: tied projection; (V, D) table streamed exactly once ------
    tb2, tv = _pick_proj_tiles(B, V, D, budget, out_bytes)
    Bp2 = _round_up(B, tb2)
    Vp = _round_up(V, tv)
    nb2 = Bp2 // tb2
    nv = Vp // tv

    if Bp2 > Bp1:
        h_in = jnp.pad(h_full, ((0, Bp2 - Bp1), (0, 0)))
    elif Bp2 < Bp1:
        h_in = h_full[:Bp2]
    else:
        h_in = h_full
    emb_p = emb_bf if Vp == V else jnp.pad(emb_bf, ((0, Vp - V), (0, 0)))

    out_p = pl.pallas_call(
        _proj_kernel,
        out_shape=jax.ShapeDtypeStruct((Bp2, Vp), out_dtype),
        # V outermost: the emb tile's block index only changes when v does, so
        # each (tv, D) slab is DMA'd once and reused across all inner B tiles.
        grid=(nv, nb2),
        in_specs=[
            pl.BlockSpec((tb2, D), lambda v, i: (i, 0)),   # h: small, re-streamed
            pl.BlockSpec((tv, D), lambda v, i: (v, 0)),    # tied emb: once per v
        ],
        out_specs=pl.BlockSpec((tb2, tv), lambda v, i: (i, v)),  # lane-dense bf16
        compiler_params=pltpu.CompilerParams(
            # V is the parallel axis -> both TensorCores on v7x get work even
            # when the whole batch fits in a single B tile. No cross-step
            # carry, so the inner B axis is "arbitrary".
            dimension_semantics=("parallel", "arbitrary"),
            vmem_limit_bytes=budget),
        cost_estimate=pl.CostEstimate(
            flops=2 * Bp2 * D * Vp,
            transcendentals=0,
            bytes_accessed=(nv * Bp2 * D * 2 + Vp * D * 2
                            + Bp2 * Vp * out_bytes)),
    )(h_in, emb_p)

    # Padded rows/columns (zero-padded inputs) never contaminate valid
    # outputs; slice them off.
    return out_p[:B, :V]


def xavier_normal(key, shape):
    # torch.nn.init.xavier_normal_ for a 2D tensor (fan_out, fan_in) = shape
    fan_out, fan_in = shape
    std = (2.0 / (fan_in + fan_out)) ** 0.5
    return std * jax.random.normal(key, shape, dtype=jnp.float32)


if __name__ == "__main__":
    # Small shapes consistent with the module.
    num_embeddings = 32   # V
    embedding_dim = 16    # D
    window = 4            # W  (linear in-features = window * embedding_dim = 64)
    batch = 8             # B
    # drop_ratio = 0.0 -> dropout layers are identity (torch stores None)

    key = jax.random.PRNGKey(0)
    k_emb, k_lin, k_x = jax.random.split(key, 3)

    # Deterministic params (xavier-normal weights, zero bias, tied embeddings).
    emb_weight = xavier_normal(k_emb, (num_embeddings, embedding_dim))           # (V, D)
    lin_weight = xavier_normal(k_lin, (embedding_dim, window * embedding_dim))   # (D, W*D)
    lin_bias = jnp.zeros((embedding_dim,), dtype=jnp.float32)

    x_idx = jax.random.randint(k_x, (batch, window), 0, num_embeddings,
                               dtype=jnp.int32)

    fwd = jax.jit(functools.partial(ffnn_forward, single_buffer_invariant=True))
    try:
        logits = jax.block_until_ready(fwd(x_idx, emb_weight, lin_weight, lin_bias))
    except Exception:
        # pipeline_mode=pl.Buffered(1) (single-buffering grid-invariant
        # operands) is a newer knob; fall back to the default double-buffered
        # pipeline if this jax build rejects it. Correctness is unaffected.
        fwd = jax.jit(functools.partial(ffnn_forward, single_buffer_invariant=False))
        logits = jax.block_until_ready(fwd(x_idx, emb_weight, lin_weight, lin_bias))

    # Pure-JAX f32 reference (kernel uses bf16 MXU operands + bf16 logits).
    flat_ref = jnp.take(emb_weight, x_idx, axis=0).reshape(batch, -1)
    h_ref = jnp.tanh(flat_ref @ lin_weight.T + lin_bias)
    ref = h_ref @ emb_weight.T

    assert logits.shape == (batch, num_embeddings)
    assert logits.dtype == jnp.bfloat16
    err = float(jnp.max(jnp.abs(logits.astype(jnp.float32) - ref)))
    assert jnp.allclose(logits.astype(jnp.float32), ref, atol=3e-2, rtol=3e-2), err

    print("KERNEL_OK")
</pallas_src>

<mosaic_0001>
module attributes {stable_mosaic.version = 11 : i64} {
  func.func @_hidden_kernel(%arg0: i32, %arg1: memref<16x64xbf16, #tpu.memory_space<vmem>>, %arg2: memref<16x64xbf16, #tpu.memory_space<vmem>>, %arg3: memref<1x16xf32, #tpu.memory_space<vmem>>, %arg4: memref<16x16xbf16, #tpu.memory_space<vmem>>) attributes {dimension_semantics = [#tpu.dimension_semantics<parallel>], iteration_bounds = array<i64: 1>, scalar_prefetch = 0 : i64, scratch_operands = 0 : i64, tpu.core_type = #tpu.core_type<tc>, window_params = [{transform_indices = @transform_0, window_bounds = array<i64: 16, 64>}, {pipeline_mode = #tpu.pipeline_mode<synchronous>, transform_indices = @transform_1, window_bounds = array<i64: 16, 64>}, {pipeline_mode = #tpu.pipeline_mode<synchronous>, transform_indices = @transform_2, window_bounds = array<i64: 1, 16>}, {transform_indices = @transform_3, window_bounds = array<i64: 16, 16>}]} {
    %c0 = arith.constant 0 : index
    %c0_0 = arith.constant 0 : index
    %0 = vector.load %arg1[%c0, %c0_0] : memref<16x64xbf16, #tpu.memory_space<vmem>>, vector<16x64xbf16>
    %c0_1 = arith.constant 0 : index
    %c0_2 = arith.constant 0 : index
    %1 = vector.load %arg2[%c0_1, %c0_2] : memref<16x64xbf16, #tpu.memory_space<vmem>>, vector<16x64xbf16>
    %cst = arith.constant dense<0.000000e+00> : vector<16x16xf32>
    %2 = tpu.matmul %0, %1, %cst {dimension_numbers = #tpu.dot_dimension_numbers<[1], [1], [0], [0], [0, 0, 1, 0], [], []>} : vector<16x64xbf16>, vector<16x64xbf16>, vector<16x16xf32> -> vector<16x16xf32>
    %c0_3 = arith.constant 0 : index
    %c0_4 = arith.constant 0 : index
    %3 = vector.load %arg3[%c0_3, %c0_4] : memref<1x16xf32, #tpu.memory_space<vmem>>, vector<1x16xf32>
    %4 = vector.broadcast %3 : vector<1x16xf32> to vector<16x16xf32>
    %5 = arith.addf %2, %4 : vector<16x16xf32>
    %6 = math.tanh %5 : vector<16x16xf32>
    %7 = arith.truncf %6 : vector<16x16xf32> to vector<16x16xbf16>
    %c0_5 = arith.constant 0 : index
    %c0_6 = arith.constant 0 : index
    %8 = vector.load %arg4[%c0_5, %c0_6] : memref<16x16xbf16, #tpu.memory_space<vmem>>, vector<16x16xbf16>
    tpu.vector_store %arg4[%c0_5, %c0_6], %7 {strides = array<i32>} : memref<16x16xbf16, #tpu.memory_space<vmem>>, vector<16x16xbf16>,
    return
  }
  func.func @transform_0(%arg0: i32) -> (i32, i32) {
    %c0_i32 = arith.constant 0 : i32
    %c0_i32_0 = arith.constant 0 : i32
    return %arg0, %c0_i32 : i32, i32
  }
  func.func @transform_1(%arg0: i32) -> (i32, i32) {
    %c0_i32 = arith.constant 0 : i32
    %c0_i32_0 = arith.constant 0 : i32
    %c0_i32_1 = arith.constant 0 : i32
    return %c0_i32, %c0_i32_0 : i32, i32
  }
  func.func @transform_2(%arg0: i32) -> (i32, i32) {
    %c0_i32 = arith.constant 0 : i32
    %c0_i32_0 = arith.constant 0 : i32
    %c0_i32_1 = arith.constant 0 : i32
    return %c0_i32, %c0_i32_0 : i32, i32
  }
  func.func @transform_3(%arg0: i32) -> (i32, i32) {
    %c0_i32 = arith.constant 0 : i32
    %c0_i32_0 = arith.constant 0 : i32
    return %arg0, %c0_i32 : i32, i32
  }
}

module attributes {stable_mosaic.version = 11 : i64} {
  func.func @_proj_kernel(%arg0: i32, %arg1: i32, %arg2: memref<16x16xbf16, #tpu.memory_space<vmem>>, %arg3: memref<128x16xbf16, #tpu.memory_space<vmem>>, %arg4: memref<16x128xbf16, #tpu.memory_space<vmem>>) attributes {dimension_semantics = [#tpu.dimension_semantics<parallel>, #tpu.dimension_semantics<arbitrary>], iteration_bounds = array<i64: 1, 1>, scalar_prefetch = 0 : i64, scratch_operands = 0 : i64, tpu.core_type = #tpu.core_type<tc>, window_params = [{transform_indices = @transform_0, window_bounds = array<i64: 16, 16>}, {transform_indices = @transform_1, window_bounds = array<i64: 128, 16>}, {transform_indices = @transform_2, window_bounds = array<i64: 16, 128>}]} {
    %c0 = arith.constant 0 : index
    %c0_0 = arith.constant 0 : index
    %0 = vector.load %arg2[%c0, %c0_0] : memref<16x16xbf16, #tpu.memory_space<vmem>>, vector<16x16xbf16>
    %c0_1 = arith.constant 0 : index
    %c0_2 = arith.constant 0 : index
    %1 = vector.load %arg3[%c0_1, %c0_2] : memref<128x16xbf16, #tpu.memory_space<vmem>>, vector<128x16xbf16>
    %cst = arith.constant dense<0.000000e+00> : vector<16x128xf32>
    %2 = tpu.matmul %0, %1, %cst {dimension_numbers = #tpu.dot_dimension_numbers<[1], [1], [0], [0], [0, 0, 1, 0], [], []>} : vector<16x16xbf16>, vector<128x16xbf16>, vector<16x128xf32> -> vector<16x128xf32>
    %3 = arith.truncf %2 : vector<16x128xf32> to vector<16x128xbf16>
    %c0_3 = arith.constant 0 : index
    %c0_4 = arith.constant 0 : index
    %4 = vector.load %arg4[%c0_3, %c0_4] : memref<16x128xbf16, #tpu.memory_space<vmem>>, vector<16x128xbf16>
    tpu.vector_store %arg4[%c0_3, %c0_4], %3 {strides = array<i32>} : memref<16x128xbf16, #tpu.memory_space<vmem>>, vector<16x128xbf16>,
    return
  }
  func.func @transform_0(%arg0: i32, %arg1: i32) -> (i32, i32) {
    %c0_i32 = arith.constant 0 : i32
    %c0_i32_0 = arith.constant 0 : i32
    return %arg1, %c0_i32 : i32, i32
  }
  func.func @transform_1(%arg0: i32, %arg1: i32) -> (i32, i32) {
    %c0_i32 = arith.constant 0 : i32
    %c0_i32_0 = arith.constant 0 : i32
    return %arg0, %c0_i32 : i32, i32
  }
  func.func @transform_2(%arg0: i32, %arg1: i32) -> (i32, i32) {
    %c0_i32 = arith.constant 0 : i32
    return %arg1, %arg0 : i32, i32
  }
}

module attributes {stable_mosaic.version = 11 : i64} {
  func.func @_hidden_kernel(%arg0: i32, %arg1: memref<16x64xbf16, #tpu.memory_space<vmem>>, %arg2: memref<16x64xbf16, #tpu.memory_space<vmem>>, %arg3: memref<1x16xf32, #tpu.memory_space<vmem>>, %arg4: memref<16x16xbf16, #tpu.memory_space<vmem>>) attributes {dimension_semantics = [#tpu.dimension_semantics<parallel>], iteration_bounds = array<i64: 1>, scalar_prefetch = 0 : i64, scratch_operands = 0 : i64, tpu.core_type = #tpu.core_type<tc>, window_params = [{transform_indices = @transform_0, window_bounds = array<i64: 16, 64>}, {pipeline_mode = #tpu.pipeline_mode<synchronous>, transform_indices = @transform_1, window_bounds = array<i64: 16, 64>}, {pipeline_mode = #tpu.pipeline_mode<synchronous>, transform_indices = @transform_2, window_bounds = array<i64: 1, 16>}, {transform_indices = @transform_3, window_bounds = array<i64: 16, 16>}]} {
    %c0 = arith.constant 0 : index
    %c0_0 = arith.constant 0 : index
    %0 = vector.load %arg1[%c0, %c0_0] : memref<16x64xbf16, #tpu.memory_space<vmem>>, vector<16x64xbf16>
    %c0_1 = arith.constant 0 : index
    %c0_2 = arith.constant 0 : index
    %1 = vector.load %arg2[%c0_1, %c0_2] : memref<16x64xbf16, #tpu.memory_space<vmem>>, vector<16x64xbf16>
    %cst = arith.constant dense<0.000000e+00> : vector<16x16xf32>
    %2 = tpu.matmul %0, %1, %cst {dimension_numbers = #tpu.dot_dimension_numbers<[1], [1], [0], [0], [0, 0, 1, 0], [], []>} : vector<16x64xbf16>, vector<16x64xbf16>, vector<16x16xf32> -> vector<16x16xf32>
    %c0_3 = arith.constant 0 : index
    %c0_4 = arith.constant 0 : index
    %3 = vector.load %arg3[%c0_3, %c0_4] : memref<1x16xf32, #tpu.memory_space<vmem>>, vector<1x16xf32>
    %4 = vector.broadcast %3 : vector<1x16xf32> to vector<16x16xf32>
    %5 = arith.addf %2, %4 : vector<16x16xf32>
    %6 = math.tanh %5 : vector<16x16xf32>
    %7 = arith.truncf %6 : vector<16x16xf32> to vector<16x16xbf16>
    %c0_5 = arith.constant 0 : index
    %c0_6 = arith.constant 0 : index
    %8 = vector.load %arg4[%c0_5, %c0_6] : memref<16x16xbf16, #tpu.memory_space<vmem>>, vector<16x16xbf16>
    tpu.vector_store %arg4[%c0_5, %c0_6], %7 {strides = array<i32>} : memref<16x16xbf16, #tpu.memory_space<vmem>>, vector<16x16xbf16>,
    return
  }
  func.func @transform_0(%arg0: i32) -> (i32, i32) {
    %c0_i32 = arith.constant 0 : i32
    %c0_i32_0 = arith.constant 0 : i32
    return %arg0, %c0_i32 : i32, i32
  }
  func.func @transform_1(%arg0: i32) -> (i32, i32) {
    %c0_i32 = arith.constant 0 : i32
    %c0_i32_0 = arith.constant 0 : i32
    %c0_i32_1 = arith.constant 0 : i32
    return %c0_i32, %c0_i32_0 : i32, i32
  }
  func.func @transform_2(%arg0: i32) -> (i32, i32) {
    %c0_i32 = arith.constant 0 : i32
    %c0_i32_0 = arith.constant 0 : i32
    %c0_i32_1 = arith.constant 0 : i32
    return %c0_i32, %c0_i32_0 : i32, i32
  }
  func.func @transform_3(%arg0: i32) -> (i32, i32) {
    %c0_i32 = arith.constant 0 : i32
    %c0_i32_0 = arith.constant 0 : i32
    return %arg0, %c0_i32 : i32, i32
  }
}

module attributes {stable_mosaic.version = 11 : i64} {
  func.func @_proj_kernel(%arg0: i32, %arg1: i32, %arg2: memref<16x16xbf16, #tpu.memory_space<vmem>>, %arg3: memref<128x16xbf16, #tpu.memory_space<vmem>>, %arg4: memref<16x128xbf16, #tpu.memory_space<vmem>>) attributes {dimension_semantics = [#tpu.dimension_semantics<parallel>, #tpu.dimension_semantics<arbitrary>], iteration_bounds = array<i64: 1, 1>, scalar_prefetch = 0 : i64, scratch_operands = 0 : i64, tpu.core_type = #tpu.core_type<tc>, window_params = [{transform_indices = @transform_0, window_bounds = array<i64: 16, 16>}, {transform_indices = @transform_1, window_bounds = array<i64: 128, 16>}, {transform_indices = @transform_2, window_bounds = array<i64: 16, 128>}]} {
    %c0 = arith.constant 0 : index
    %c0_0 = arith.constant 0 : index
    %0 = vector.load %arg2[%c0, %c0_0] : memref<16x16xbf16, #tpu.memory_space<vmem>>, vector<16x16xbf16>
    %c0_1 = arith.constant 0 : index
    %c0_2 = arith.constant 0 : index
    %1 = vector.load %arg3[%c0_1, %c0_2] : memref<128x16xbf16, #tpu.memory_space<vmem>>, vector<128x16xbf16>
    %cst = arith.constant dense<0.000000e+00> : vector<16x128xf32>
    %2 = tpu.matmul %0, %1, %cst {dimension_numbers = #tpu.dot_dimension_numbers<[1], [1], [0], [0], [0, 0, 1, 0], [], []>} : vector<16x16xbf16>, vector<128x16xbf16>, vector<16x128xf32> -> vector<16x128xf32>
    %3 = arith.truncf %2 : vector<16x128xf32> to vector<16x128xbf16>
    %c0_3 = arith.constant 0 : index
    %c0_4 = arith.constant 0 : index
    %4 = vector.load %arg4[%c0_3, %c0_4] : memref<16x128xbf16, #tpu.memory_space<vmem>>, vector<16x128xbf16>
    tpu.vector_store %arg4[%c0_3, %c0_4], %3 {strides = array<i32>} : memref<16x128xbf16, #tpu.memory_space<vmem>>, vector<16x128xbf16>,
    return
  }
  func.func @transform_0(%arg0: i32, %arg1: i32) -> (i32, i32) {
    %c0_i32 = arith.constant 0 : i32
    %c0_i32_0 = arith.constant 0 : i32
    return %arg1, %c0_i32 : i32, i32
  }
  func.func @transform_1(%arg0: i32, %arg1: i32) -> (i32, i32) {
    %c0_i32 = arith.constant 0 : i32
    %c0_i32_0 = arith.constant 0 : i32
    return %arg0, %c0_i32 : i32, i32
  }
  func.func @transform_2(%arg0: i32, %arg1: i32) -> (i32, i32) {
    %c0_i32 = arith.constant 0 : i32
    return %arg1, %arg0 : i32, i32
  }
}

</mosaic_0001>

<llo_original>
// kernel: ffnn_forward.2
$region0: #{ffnn_forward.2}
  #allocation0 [shape = 'u32[]', space=smem, size = 0x4, offset = 0x4, fixed_abs, tag = 'smem constant byte address 0x4 - core index']
  #allocation1 [shape = 'u32[72,128]{1,0:T(1,128)}', space=vmem, size = 0x9000, scoped, tag = 'internal scratch']
  %s0 = inlined_call_operand.vmem [shape: bf16[16,64], index: 0, kind: input, shape index: {}]
  %s1 = inlined_call_operand.vmem [shape: bf16[16,64], index: 1, kind: input, shape index: {}]
  %s2 = inlined_call_operand.vmem [shape: f32[1,16], index: 2, kind: input, shape index: {}]
  %s3 = inlined_call_operand.vmem [shape: bf16[16,16], index: 3, kind: output, shape index: {}]
  %s4 = sld [smem:[#allocation0]]
  $region22: #{ffnn_forward.2} parent=0
    _
  %s6 = ssub.s32 1, %s4
  %s7 = scalar_select 0, %s6, %s4
  // Predicated region
  $region2: #{ffnn_forward.2} parent=0 // pred_check
    _
  $region3: #{ffnn_forward.2} parent=0 // pred_check_branch
    %9 = sbr.rel (0) target = $region5
  $region4: #{ffnn_forward.2} parent=0 // pred_region
    _
  $region5: #{ffnn_forward.2} parent=0 // pred_fallthru
    _
  // Predicated region
  $region6: #{ffnn_forward.2} parent=0 // pred_check
    _
  $region7: #{ffnn_forward.2} parent=0 // pred_check_branch
    %11 = sbr.rel (0) target = $region9
  $region8: #{ffnn_forward.2} parent=0 // pred_region
    _
  $region9: #{ffnn_forward.2} parent=0 // pred_fallthru
    _
  // Predicated region
  $region10: #{ffnn_forward.2} parent=0 // pred_check
    _
  $region11: #{ffnn_forward.2} parent=0 // pred_check_branch
    %13 = sbr.rel (0) target = $region13
  $region12: #{ffnn_forward.2} parent=0 // pred_region
    _
  $region13: #{ffnn_forward.2} parent=0 // pred_fallthru
    _
  %v15 = vld [vmem:[%s0] sm:$0xf]
  %v16 = vld [vmem:[%s0 + $0x4] sm:$0xf]
  %v17 = vld [vmem:[%s1] sm:$0xf]
  %v18 = vld [vmem:[%s1 + $0x4] sm:$0xf]
  %v19 = vld [vmem:[%s2] sm:$0x1]
  %v21 = vperm.slane %v19, 0
  %v25 = vunpack.c.l.b16 %v15
  %v26 = vunpack.c.l.b16 %v16
  %v27 = vpack.c.b16 %v26, %v25
  %v30 = vunpack.c.l.b16 %v17
  %v31 = vunpack.c.l.b16 %v18
  %v32 = vpack.c.b16 %v31, %v30
  %vm33 = vcmask 523264
  %v35 = vsel %vm33, %v27, 0
  %v38 = vsel %vm33, %v32, 0
  %40 = vmatpush.bf16.xpose.msra.mxu0 0
  %41 = vmatpush.bf16.xpose.msra.mxu0 0
  %42 = vmatpush.bf16.xpose.msra.mxu0 0
  %43 = vmatpush.bf16.xpose.msra.mxu0 0
  %44 = vmatpush.bf16.xpose.msra.mxu0 0
  %45 = vmatpush.bf16.xpose.msra.mxu0 0
  %46 = vmatpush.bf16.xpose.msra.mxu0 0
  %47 = vmatpush.bf16.xpose.msra.mxu0 %v38
  %48 = vmatmul.bf16.gmra.mxu0 %v35
  %v49 = vpop.f32.mrf.mxu0
  %v50 = vadd.f32 %v21, %v49
  %v51 = vpop.f32.mrf.mxu0
  %v52 = vadd.f32 %v21, %v51
  %53 = vdwg.mxu0
  %v54 = vtanh.pop %v50
  %v55 = vtanh.pop %v52
  %v56 = vpack.c.bf16 %v54, %v54
  %v57 = vpack.c.bf16 %v55, %v55
  %vm58 = vcmask 125952
  %59 = vst.msk [vmem:[%s3] sm:$0xf] %vm58, %v56
  %60 = vst.msk [vmem:[%s3 + $0x4] sm:$0xf] %vm58, %v57
  // Predicated region
  $region14: #{ffnn_forward.2} parent=0 // pred_check
    _
  $region15: #{ffnn_forward.2} parent=0 // pred_check_branch
    %62 = sbr.rel (0) target = $region17
  $region16: #{ffnn_forward.2} parent=0 // pred_region
    _
  $region17: #{ffnn_forward.2} parent=0 // pred_fallthru
    _
  // Predicated region
  $region18: #{ffnn_forward.2} parent=0 // pred_check
    _
  $region19: #{ffnn_forward.2} parent=0 // pred_check_branch
    %64 = sbr.rel (0) target = $region21
  $region20: #{ffnn_forward.2} parent=0 // pred_region
    _
  $region21: #{ffnn_forward.2} parent=0 // pred_fallthru
    _

// kernel: ffnn_forward.3
$region0: #{ffnn_forward.3}
  #allocation0 [shape = 'u32[]', space=smem, size = 0x4, offset = 0x4, fixed_abs, tag = 'smem constant byte address 0x4 - core index']
  #allocation1 [shape = 'u32[72,128]{1,0:T(1,128)}', space=vmem, size = 0x9000, scoped, tag = 'internal scratch']
  %s0 = inlined_call_operand.vmem [shape: bf16[16,16], index: 0, kind: input, shape index: {}]
  %s1 = inlined_call_operand.vmem [shape: bf16[128,16], index: 1, kind: input, shape index: {}]
  %s2 = inlined_call_operand.vmem [shape: bf16[16,128], index: 2, kind: output, shape index: {}]
  %s3 = sld [smem:[#allocation0]]
  $region18: #{ffnn_forward.3} parent=0
    _
  %s5 = ssub.s32 1, %s3
  %s6 = scalar_select 0, %s5, %s3
  // Predicated region
  $region2: #{ffnn_forward.3} parent=0 // pred_check
    _
  $region3: #{ffnn_forward.3} parent=0 // pred_check_branch
    %8 = sbr.rel (0) target = $region5
  $region4: #{ffnn_forward.3} parent=0 // pred_region
    _
  $region5: #{ffnn_forward.3} parent=0 // pred_fallthru
    _
  // Predicated region
  $region6: #{ffnn_forward.3} parent=0 // pred_check
    _
  $region7: #{ffnn_forward.3} parent=0 // pred_check_branch
    %10 = sbr.rel (0) target = $region9
  $region8: #{ffnn_forward.3} parent=0 // pred_region
    _
  $region9: #{ffnn_forward.3} parent=0 // pred_fallthru
    _
  %v11 = vld [vmem:[%s0] sm:$0xf]
  %v12 = vld [vmem:[%s0 + $0x4] sm:$0xf]
  %v13 = vld [vmem:[%s1] sm:$0xf]
  %v14 = vld [vmem:[%s1 + $0x4] sm:$0xf]
  %v15 = vld [vmem:[%s1 + $0x8] sm:$0xf]
  %v16 = vld [vmem:[%s1 + $0xc] sm:$0xf]
  %v17 = vld [vmem:[%s1 + $0x10] sm:$0xf]
  %v18 = vld [vmem:[%s1 + $0x14] sm:$0xf]
  %v19 = vld [vmem:[%s1 + $0x18] sm:$0xf]
  %v20 = vld [vmem:[%s1 + $0x1c] sm:$0xf]
  %v21 = vld [vmem:[%s1 + $0x20] sm:$0xf]
  %v22 = vld [vmem:[%s1 + $0x24] sm:$0xf]
  %v23 = vld [vmem:[%s1 + $0x28] sm:$0xf]
  %v24 = vld [vmem:[%s1 + $0x2c] sm:$0xf]
  %v25 = vld [vmem:[%s1 + $0x30] sm:$0xf]
  %v26 = vld [vmem:[%s1 + $0x34] sm:$0xf]
  %v27 = vld [vmem:[%s1 + $0x38] sm:$0xf]
  %v28 = vld [vmem:[%s1 + $0x3c] sm:$0xf]
  %v31 = vunpack.c.l.b16 %v11
  %v32 = vunpack.c.l.b16 %v12
  %v33 = vpack.c.b16 %v32, %v31
  %v50 = vunpack.c.l.b16 %v13
  %v51 = vunpack.c.l.b16 %v14
  %v52 = vunpack.c.l.b16 %v15
  %v53 = vunpack.c.l.b16 %v16
  %v54 = vunpack.c.l.b16 %v17
  %v55 = vunpack.c.l.b16 %v18
  %v56 = vunpack.c.l.b16 %v19
  %v57 = vunpack.c.l.b16 %v20
  %v58 = vunpack.c.l.b16 %v21
  %v59 = vunpack.c.l.b16 %v22
  %v60 = vunpack.c.l.b16 %v23
  %v61 = vunpack.c.l.b16 %v24
  %v62 = vunpack.c.l.b16 %v25
  %v63 = vunpack.c.l.b16 %v26
  %v64 = vunpack.c.l.b16 %v27
  %v65 = vunpack.c.l.b16 %v28
  %v66 = vpack.c.b16 %v51, %v50
  %v67 = vpack.c.b16 %v53, %v52
  %v68 = vpack.c.b16 %v55, %v54
  %v69 = vpack.c.b16 %v57, %v56
  %v70 = vpack.c.b16 %v59, %v58
  %v71 = vpack.c.b16 %v61, %v60
  %v72 = vpack.c.b16 %v63, %v62
  %v73 = vpack.c.b16 %v65, %v64
  %vm74 = vcmask 130048
  %v76 = vsel %vm74, %v33, 0
  %v79 = vsel %vm74, %v66, 0
  %v82 = vsel %vm74, %v67, 0
  %v85 = vsel %vm74, %v68, 0
  %v88 = vsel %vm74, %v69, 0
  %v91 = vsel %vm74, %v70, 0
  %v94 = vsel %vm74, %v71, 0
  %v97 = vsel %vm74, %v72, 0
  %v100 = vsel %vm74, %v73, 0
  %102 = vmatpush.bf16.xpose.msra.mxu0 %v100
  %103 = vmatpush.bf16.xpose.msra.mxu0 %v97
  %104 = vmatpush.bf16.xpose.msra.mxu0 %v94
  %105 = vmatpush.bf16.xpose.msra.mxu0 %v91
  %106 = vmatpush.bf16.xpose.msra.mxu0 %v88
  %107 = vmatpush.bf16.xpose.msra.mxu0 %v85
  %108 = vmatpush.bf16.xpose.msra.mxu0 %v82
  %109 = vmatpush.bf16.xpose.msra.mxu0 %v79
  %110 = vmatmul.bf16.gmra.mxu0 %v76
  %v111 = vpop.f32.mrf.mxu0
  %v112 = vadd.f32 0.0, %v111
  %v113 = vpop.f32.mrf.mxu0
  %v114 = vadd.f32 0.0, %v113
  %115 = vdwg.mxu0
  %v116 = vpack.c.bf16 %v112, %v112
  %v117 = vpack.c.bf16 %v114, %v114
  %118 = vst [vmem:[%s2] sm:$0xf] %v116
  %119 = vst [vmem:[%s2 + $0x4] sm:$0xf] %v117
  // Predicated region
  $region10: #{ffnn_forward.3} parent=0 // pred_check
    _
  $region11: #{ffnn_forward.3} parent=0 // pred_check_branch
    %121 = sbr.rel (0) target = $region13
  $region12: #{ffnn_forward.3} parent=0 // pred_region
    _
  $region13: #{ffnn_forward.3} parent=0 // pred_fallthru
    _
  // Predicated region
  $region14: #{ffnn_forward.3} parent=0 // pred_check
    _
  $region15: #{ffnn_forward.3} parent=0 // pred_check_branch
    %123 = sbr.rel (0) target = $region17
  $region16: #{ffnn_forward.3} parent=0 // pred_region
    _
  $region17: #{ffnn_forward.3} parent=0 // pred_fallthru
    _

// kernel: ffnn_forward.2
$region0: #{ffnn_forward.2}
  #allocation0 [shape = 'u32[]', space=smem, size = 0x4, offset = 0x4, fixed_abs, tag = 'smem constant byte address 0x4 - core index']
  #allocation1 [shape = 'u32[72,128]{1,0:T(1,128)}', space=vmem, size = 0x9000, scoped, tag = 'internal scratch']
  %s0 = inlined_call_operand.vmem [shape: bf16[16,64], index: 0, kind: input, shape index: {}]
  %s1 = inlined_call_operand.vmem [shape: bf16[16,64], index: 1, kind: input, shape index: {}]
  %s2 = inlined_call_operand.vmem [shape: f32[1,16], index: 2, kind: input, shape index: {}]
  %s3 = inlined_call_operand.vmem [shape: bf16[16,16], index: 3, kind: output, shape index: {}]
  %s4 = sld [smem:[#allocation0]]
  $region22: #{ffnn_forward.2} parent=0
    _
  %s6 = ssub.s32 1, %s4
  %s7 = scalar_select 0, %s6, %s4
  // Predicated region
  $region2: #{ffnn_forward.2} parent=0 // pred_check
    _
  $region3: #{ffnn_forward.2} parent=0 // pred_check_branch
    %9 = sbr.rel (0) target = $region5
  $region4: #{ffnn_forward.2} parent=0 // pred_region
    _
  $region5: #{ffnn_forward.2} parent=0 // pred_fallthru
    _
  // Predicated region
  $region6: #{ffnn_forward.2} parent=0 // pred_check
    _
  $region7: #{ffnn_forward.2} parent=0 // pred_check_branch
    %11 = sbr.rel (0) target = $region9
  $region8: #{ffnn_forward.2} parent=0 // pred_region
    _
  $region9: #{ffnn_forward.2} parent=0 // pred_fallthru
    _
  // Predicated region
  $region10: #{ffnn_forward.2} parent=0 // pred_check
    _
  $region11: #{ffnn_forward.2} parent=0 // pred_check_branch
    %13 = sbr.rel (0) target = $region13
  $region12: #{ffnn_forward.2} parent=0 // pred_region
    _
  $region13: #{ffnn_forward.2} parent=0 // pred_fallthru
    _
  %v15 = vld [vmem:[%s0] sm:$0xf]
  %v16 = vld [vmem:[%s0 + $0x4] sm:$0xf]
  %v17 = vld [vmem:[%s1] sm:$0xf]
  %v18 = vld [vmem:[%s1 + $0x4] sm:$0xf]
  %v19 = vld [vmem:[%s2] sm:$0x1]
  %v21 = vperm.slane %v19, 0
  %v25 = vunpack.c.l.b16 %v15
  %v26 = vunpack.c.l.b16 %v16
  %v27 = vpack.c.b16 %v26, %v25
  %v30 = vunpack.c.l.b16 %v17
  %v31 = vunpack.c.l.b16 %v18
  %v32 = vpack.c.b16 %v31, %v30
  %vm33 = vcmask 523264
  %v35 = vsel %vm33, %v27, 0
  %v38 = vsel %vm33, %v32, 0
  %40 = vmatpush.bf16.xpose.msra.mxu0 0
  %41 = vmatpush.bf16.xpose.msra.mxu0 0
  %42 = vmatpush.bf16.xpose.msra.mxu0 0
  %43 = vmatpush.bf16.xpose.msra.mxu0 0
  %44 = vmatpush.bf16.xpose.msra.mxu0 0
  %45 = vmatpush.bf16.xpose.msra.mxu0 0
  %46 = vmatpush.bf16.xpose.msra.mxu0 0
  %47 = vmatpush.bf16.xpose.msra.mxu0 %v38
  %48 = vmatmul.bf16.gmra.mxu0 %v35
  %v49 = vpop.f32.mrf.mxu0
  %v50 = vadd.f32 %v21, %v49
  %v51 = vpop.f32.mrf.mxu0
  %v52 = vadd.f32 %v21, %v51
  %53 = vdwg.mxu0
  %v54 = vtanh.pop %v50
  %v55 = vtanh.pop %v52
  %v56 = vpack.c.bf16 %v54, %v54
  %v57 = vpack.c.bf16 %v55, %v55
  %vm58 = vcmask 125952
  %59 = vst.msk [vmem:[%s3] sm:$0xf] %vm58, %v56
  %60 = vst.msk [vmem:[%s3 + $0x4] sm:$0xf] %vm58, %v57
  // Predicated region
  $region14: #{ffnn_forward.2} parent=0 // pred_check
    _
  $region15: #{ffnn_forward.2} parent=0 // pred_check_branch
    %62 = sbr.rel (0) target = $region17
  $region16: #{ffnn_forward.2} parent=0 // pred_region
    _
  $region17: #{ffnn_forward.2} parent=0 // pred_fallthru
    _
  // Predicated region
  $region18: #{ffnn_forward.2} parent=0 // pred_check
    _
  $region19: #{ffnn_forward.2} parent=0 // pred_check_branch
    %64 = sbr.rel (0) target = $region21
  $region20: #{ffnn_forward.2} parent=0 // pred_region
    _
  $region21: #{ffnn_forward.2} parent=0 // pred_fallthru
    _

// kernel: ffnn_forward.3
$region0: #{ffnn_forward.3}
  #allocation0 [shape = 'u32[]', space=smem, size = 0x4, offset = 0x4, fixed_abs, tag = 'smem constant byte address 0x4 - core index']
  #allocation1 [shape = 'u32[72,128]{1,0:T(1,128)}', space=vmem, size = 0x9000, scoped, tag = 'internal scratch']
  %s0 = inlined_call_operand.vmem [shape: bf16[16,16], index: 0, kind: input, shape index: {}]
  %s1 = inlined_call_operand.vmem [shape: bf16[128,16], index: 1, kind: input, shape index: {}]
  %s2 = inlined_call_operand.vmem [shape: bf16[16,128], index: 2, kind: output, shape index: {}]
  %s3 = sld [smem:[#allocation0]]
  $region18: #{ffnn_forward.3} parent=0
    _
  %s5 = ssub.s32 1, %s3
  %s6 = scalar_select 0, %s5, %s3
  // Predicated region
  $region2: #{ffnn_forward.3} parent=0 // pred_check
    _
  $region3: #{ffnn_forward.3} parent=0 // pred_check_branch
    %8 = sbr.rel (0) target = $region5
  $region4: #{ffnn_forward.3} parent=0 // pred_region
    _
  $region5: #{ffnn_forward.3} parent=0 // pred_fallthru
    _
  // Predicated region
  $region6: #{ffnn_forward.3} parent=0 // pred_check
    _
  $region7: #{ffnn_forward.3} parent=0 // pred_check_branch
    %10 = sbr.rel (0) target = $region9
  $region8: #{ffnn_forward.3} parent=0 // pred_region
    _
  $region9: #{ffnn_forward.3} parent=0 // pred_fallthru
    _
  %v11 = vld [vmem:[%s0] sm:$0xf]
  %v12 = vld [vmem:[%s0 + $0x4] sm:$0xf]
  %v13 = vld [vmem:[%s1] sm:$0xf]
  %v14 = vld [vmem:[%s1 + $0x4] sm:$0xf]
  %v15 = vld [vmem:[%s1 + $0x8] sm:$0xf]
  %v16 = vld [vmem:[%s1 + $0xc] sm:$0xf]
  %v17 = vld [vmem:[%s1 + $0x10] sm:$0xf]
  %v18 = vld [vmem:[%s1 + $0x14] sm:$0xf]
  %v19 = vld [vmem:[%s1 + $0x18] sm:$0xf]
  %v20 = vld [vmem:[%s1 + $0x1c] sm:$0xf]
  %v21 = vld [vmem:[%s1 + $0x20] sm:$0xf]
  %v22 = vld [vmem:[%s1 + $0x24] sm:$0xf]
  %v23 = vld [vmem:[%s1 + $0x28] sm:$0xf]
  %v24 = vld [vmem:[%s1 + $0x2c] sm:$0xf]
  %v25 = vld [vmem:[%s1 + $0x30] sm:$0xf]
  %v26 = vld [vmem:[%s1 + $0x34] sm:$0xf]
  %v27 = vld [vmem:[%s1 + $0x38] sm:$0xf]
  %v28 = vld [vmem:[%s1 + $0x3c] sm:$0xf]
  %v31 = vunpack.c.l.b16 %v11
  %v32 = vunpack.c.l.b16 %v12
  %v33 = vpack.c.b16 %v32, %v31
  %v50 = vunpack.c.l.b16 %v13
  %v51 = vunpack.c.l.b16 %v14
  %v52 = vunpack.c.l.b16 %v15
  %v53 = vunpack.c.l.b16 %v16
  %v54 = vunpack.c.l.b16 %v17
  %v55 = vunpack.c.l.b16 %v18
  %v56 = vunpack.c.l.b16 %v19
  %v57 = vunpack.c.l.b16 %v20
  %v58 = vunpack.c.l.b16 %v21
  %v59 = vunpack.c.l.b16 %v22
  %v60 = vunpack.c.l.b16 %v23
  %v61 = vunpack.c.l.b16 %v24
  %v62 = vunpack.c.l.b16 %v25
  %v63 = vunpack.c.l.b16 %v26
  %v64 = vunpack.c.l.b16 %v27
  %v65 = vunpack.c.l.b16 %v28
  %v66 = vpack.c.b16 %v51, %v50
  %v67 = vpack.c.b16 %v53, %v52
  %v68 = vpack.c.b16 %v55, %v54
  %v69 = vpack.c.b16 %v57, %v56
  %v70 = vpack.c.b16 %v59, %v58
  %v71 = vpack.c.b16 %v61, %v60
  %v72 = vpack.c.b16 %v63, %v62
  %v73 = vpack.c.b16 %v65, %v64
  %vm74 = vcmask 130048
  %v76 = vsel %vm74, %v33, 0
  %v79 = vsel %vm74, %v66, 0
  %v82 = vsel %vm74, %v67, 0
  %v85 = vsel %vm74, %v68, 0
  %v88 = vsel %vm74, %v69, 0
  %v91 = vsel %vm74, %v70, 0
  %v94 = vsel %vm74, %v71, 0
  %v97 = vsel %vm74, %v72, 0
  %v100 = vsel %vm74, %v73, 0
  %102 = vmatpush.bf16.xpose.msra.mxu0 %v100
  %103 = vmatpush.bf16.xpose.msra.mxu0 %v97
  %104 = vmatpush.bf16.xpose.msra.mxu0 %v94
  %105 = vmatpush.bf16.xpose.msra.mxu0 %v91
  %106 = vmatpush.bf16.xpose.msra.mxu0 %v88
  %107 = vmatpush.bf16.xpose.msra.mxu0 %v85
  %108 = vmatpush.bf16.xpose.msra.mxu0 %v82
  %109 = vmatpush.bf16.xpose.msra.mxu0 %v79
  %110 = vmatmul.bf16.gmra.mxu0 %v76
  %v111 = vpop.f32.mrf.mxu0
  %v112 = vadd.f32 0.0, %v111
  %v113 = vpop.f32.mrf.mxu0
  %v114 = vadd.f32 0.0, %v113
  %115 = vdwg.mxu0
  %v116 = vpack.c.bf16 %v112, %v112
  %v117 = vpack.c.bf16 %v114, %v114
  %118 = vst [vmem:[%s2] sm:$0xf] %v116
  %119 = vst [vmem:[%s2 + $0x4] sm:$0xf] %v117
  // Predicated region
  $region10: #{ffnn_forward.3} parent=0 // pred_check
    _
  $region11: #{ffnn_forward.3} parent=0 // pred_check_branch
    %121 = sbr.rel (0) target = $region13
  $region12: #{ffnn_forward.3} parent=0 // pred_region
    _
  $region13: #{ffnn_forward.3} parent=0 // pred_fallthru
    _
  // Predicated region
  $region14: #{ffnn_forward.3} parent=0 // pred_check
    _
  $region15: #{ffnn_forward.3} parent=0 // pred_check_branch
    %123 = sbr.rel (0) target = $region17
  $region16: #{ffnn_forward.3} parent=0 // pred_region
    _
  $region17: #{ffnn_forward.3} parent=0 // pred_fallthru
    _

</llo_original>
